<compile_context>
chip_gen: v6e
topology: v6e:2x2x1
jax: 0.10.0
libtpu: 0.0.40
codegen_flags: <defaults>
</compile_context>

<pallas_src>
import functools

import numpy as np
import jax
import jax.numpy as jnp
from jax.experimental import pallas as pl
from jax.experimental.pallas import tpu as pltpu


def _round_up(x, m):
    return (x + m - 1) // m * m


def _triple_conv_fused_kernel(mask_ref, x_ref, w1_ref, b1_ref, w2_ref, b2_ref,
                              w3_ref, b3_ref, o_ref, *, wp, neg_slope):
    """Fused 3x (3x3 conv + bias + LeakyReLU) over a lane-flattened batch.

    mask_ref: (1, L)  f32; 1.0 at interior pixels, 0.0 at padding ring / tail
    x_ref:    (Cin, L)      zero-padded, batch-folded, flattened input
    wN_ref:   (3*CoutN, 3*CinN) prepacked: [g*Cout+co, h*Cin+ci] = W[co,ci,ky=h,kx=g]
    bN_ref:   (CoutN, 1) f32
    o_ref:    (Cout3, L)    flattened padded output (interior lanes valid)
    """
    L = mask_ref.shape[-1]
    mask = mask_ref[...]                                      # (1, L) f32

    def conv3x3_lrelu(x, w_ref, b_ref, *, apply_mask):
        # x: (Cin, L), already zero at all padding / tail lanes.
        cout = w_ref.shape[0] // 3
        # dy = -1/0/+1 taps: stack[h*Cin+ci, p] = x[ci, p + (h-1)*Wp]
        # (roll(x, s)[p] == x[p - s]; wrap lanes only affect masked positions.)
        x_h0 = pltpu.roll(x, wp, axis=1)                      # reads x[p - Wp] (ky=0)
        x_h2 = pltpu.roll(x, L - wp, axis=1)                  # reads x[p + Wp] (ky=2)
        stack = jnp.concatenate([x_h0, x, x_h2], axis=0)      # (3*Cin, L)
        # One MXU matmul per layer (dy folded into K, dx folded into M).
        y = jnp.dot(w_ref[...], stack, preferred_element_type=jnp.float32)
        # Recombine dx = -1/0/+1 partials with two +-1 lane rolls of the output.
        acc = (y[cout:2 * cout]
               + pltpu.roll(y[:cout], 1, axis=1)              # dx = -1
               + pltpu.roll(y[2 * cout:], L - 1, axis=1))     # dx = +1
        acc = acc + b_ref[...]                                # (Cout,1) lane-bcast
        acc = jnp.maximum(acc, neg_slope * acc)               # LeakyReLU(0.2)
        if apply_mask:
            # Re-zero padding ring + tail so the next layer's implicit zero
            # padding (and the roll wrap lanes) stay exact.
            acc = acc * mask
        return acc

    a1 = conv3x3_lrelu(x_ref[...], w1_ref, b1_ref, apply_mask=True)
    a2 = conv3x3_lrelu(a1.astype(w2_ref.dtype), w2_ref, b2_ref, apply_mask=True)
    out = conv3x3_lrelu(a2.astype(w3_ref.dtype), w3_ref, b3_ref, apply_mask=False)
    o_ref[...] = out.astype(o_ref.dtype)


def _prepack_weight(w_oihw, cin_pad, cout_pad, dtype):
    """(Cout, Cin, 3, 3) -> (3*cout_pad, 3*cin_pad), zero channel padding,
    layout: big[g*cout_pad + co, h*cin_pad + ci] = W[co, ci, ky=h, kx=g]."""
    cout, cin = w_oihw.shape[:2]
    w_pad = jnp.zeros((cout_pad, cin_pad, 3, 3), w_oihw.dtype)
    w_pad = w_pad.at[:cout, :cin].set(w_oihw)
    big = jnp.transpose(w_pad, (3, 0, 2, 1)).reshape(3 * cout_pad, 3 * cin_pad)
    return big.astype(dtype)


def _pad_bias(b, cout_pad):
    return jnp.pad(b, (0, cout_pad - b.shape[0])).reshape(cout_pad, 1).astype(jnp.float32)


def _interior_mask(hp, wp, batch, total):
    n = hp * wp
    lane = jnp.arange(n)
    row, col = lane // wp, lane % wp
    m = ((row >= 1) & (row <= hp - 2) & (col >= 1) & (col <= wp - 2))
    m = jnp.tile(m.astype(jnp.float32), batch)
    return jnp.pad(m, (0, total - batch * n)).reshape(1, total)


def triple_conv_forward(x_nchw, params, *, neg_slope=0.2,
                        matmul_dtype=jnp.float32):
    """Matches TripleConv.forward: NCHW in, NCHW out."""
    B, Cin, H, W = x_nchw.shape
    Hp, Wp = H + 2, W + 2
    n = Hp * Wp
    L = _round_up(B * n, 128)               # lane-dense flat extent, batch folded in

    (w1, b1), (w2, b2), (w3, b3) = params
    C1, C2, C3 = w1.shape[0], w2.shape[0], w3.shape[0]
    cin_p = _round_up(Cin, 8)
    c1_p, c2_p, c3_p = (_round_up(c, 8) for c in (C1, C2, C3))

    # Pad once (zero ring for layer 1 + channel pad), fold batch into lanes.
    xp = jnp.pad(x_nchw, ((0, 0), (0, cin_p - Cin), (1, 1), (1, 1)))
    xf = jnp.transpose(xp, (1, 0, 2, 3)).reshape(cin_p, B * n)
    xf = jnp.pad(xf, ((0, 0), (0, L - B * n))).astype(matmul_dtype)

    mask = _interior_mask(Hp, Wp, B, L)

    w1p = _prepack_weight(w1, cin_p, c1_p, matmul_dtype)
    w2p = _prepack_weight(w2, c1_p, c2_p, matmul_dtype)
    w3p = _prepack_weight(w3, c2_p, c3_p, matmul_dtype)
    b1p, b2p, b3p = _pad_bias(b1, c1_p), _pad_bias(b2, c2_p), _pad_bias(b3, c3_p)

    # Explicit VMEM budget for the real working set (review item).
    act = np.dtype(matmul_dtype).itemsize
    out_b = np.dtype(x_nchw.dtype).itemsize
    cmax = max(cin_p, c1_p, c2_p, c3_p)
    est = L * (2 * (cin_p * act + c3_p * out_b)      # (double-buffered) I/O blocks
               + (c1_p + c2_p) * act                 # fused intermediates
               + 3 * cmax * act                      # dy im2col stack
               + 6 * cmax * 4)                       # f32 matmul partials + acc
    vmem_limit = int(min(112 << 20, max(2 * est, 16 << 20)))

    kernel = functools.partial(_triple_conv_fused_kernel, wp=Wp,
                               neg_slope=neg_slope)

    out_flat = pl.pallas_call(
        kernel,
        out_shape=jax.ShapeDtypeStruct((c3_p, L), x_nchw.dtype),
        grid_spec=pltpu.PrefetchScalarGridSpec(
            num_scalar_prefetch=0,
            # TODO(synk): add a row-strip "parallel" grid axis for large H,W / v7x.
            grid=(1,),
            in_specs=[
                pl.BlockSpec((1, L), lambda i: (0, 0)),                  # mask
                pl.BlockSpec((cin_p, L), lambda i: (0, 0)),              # x
                pl.BlockSpec((3 * c1_p, 3 * cin_p), lambda i: (0, 0)),   # w1
                pl.BlockSpec((c1_p, 1), lambda i: (0, 0)),               # b1
                pl.BlockSpec((3 * c2_p, 3 * c1_p), lambda i: (0, 0)),    # w2
                pl.BlockSpec((c2_p, 1), lambda i: (0, 0)),               # b2
                pl.BlockSpec((3 * c3_p, 3 * c2_p), lambda i: (0, 0)),    # w3
                pl.BlockSpec((c3_p, 1), lambda i: (0, 0)),               # b3
            ],
            out_specs=pl.BlockSpec((c3_p, L), lambda i: (0, 0)),
        ),
        compiler_params=pltpu.CompilerParams(
            dimension_semantics=("arbitrary",),
            vmem_limit_bytes=vmem_limit),
    )(mask, xf, w1p, b1p, w2p, b2p, w3p, b3p)

    out = out_flat[:C3, :B * n].reshape(C3, B, Hp, Wp)
    out = jnp.transpose(out, (1, 0, 2, 3))
    return out[:, :, 1:H + 1, 1:W + 1]


def make_triple_conv_params(key, in_channels, out_channels, mid_channels=None):
    """Deterministic synthetic parameters, OIHW like the PyTorch module."""
    if not mid_channels:
        mid_channels = out_channels
    chans = [(in_channels, mid_channels),
             (mid_channels, mid_channels),
             (mid_channels, out_channels)]
    params = []
    for i, (cin, cout) in enumerate(chans):
        kw_key, kb_key = jax.random.split(jax.random.fold_in(key, i))
        w = 0.1 * jax.random.normal(kw_key, (cout, cin, 3, 3), dtype=jnp.float32)
        b = 0.1 * jax.random.normal(kb_key, (cout,), dtype=jnp.float32)
        params.append((w, b))
    return params


# ---------------------------------------------------------------------------
# Reference (pure JAX) for correctness checking.
# ---------------------------------------------------------------------------
def _reference_forward(x_nchw, params, neg_slope=0.2):
    x = x_nchw
    for (w, b) in params:
        y = jax.lax.conv_general_dilated(
            x, w, window_strides=(1, 1), padding=((1, 1), (1, 1)),
            dimension_numbers=("NCHW", "OIHW", "NCHW"))
        y = y + b.reshape(1, -1, 1, 1)
        x = jnp.where(y > 0, y, neg_slope * y)
    return x


if __name__ == "__main__":
    key = jax.random.PRNGKey(0)
    xkey, pkey = jax.random.split(key)

    B, Cin, H, W = 2, 4, 16, 16
    Cout = 8
    x = jax.random.normal(xkey, (B, Cin, H, W), dtype=jnp.float32)
    params = make_triple_conv_params(pkey, in_channels=Cin, out_channels=Cout)

    ref = _reference_forward(x, params)

    # Exact-parity path (f32 MXU operands).
    out = jax.block_until_ready(
        triple_conv_forward(x, params, matmul_dtype=jnp.float32))
    assert out.shape == (B, Cout, H, W), out.shape
    assert jnp.allclose(out, ref, atol=1e-4, rtol=1e-4), (
        float(jnp.max(jnp.abs(out - ref))))

    # bf16-operand path (v6e/v7x MXU-native); looser tolerance per review.
    out_bf16 = jax.block_until_ready(
        triple_conv_forward(x, params, matmul_dtype=jnp.bfloat16))
    assert jnp.allclose(out_bf16, ref, atol=5e-2, rtol=5e-2), (
        float(jnp.max(jnp.abs(out_bf16 - ref))))

    print("KERNEL_OK")
</pallas_src>

<mosaic_0001>
module attributes {stable_mosaic.version = 11 : i64} {
  func.func @_triple_conv_fused_kernel(%arg0: i32, %arg1: memref<1x768xf32, #tpu.memory_space<vmem>>, %arg2: memref<8x768xf32, #tpu.memory_space<vmem>>, %arg3: memref<24x24xf32, #tpu.memory_space<vmem>>, %arg4: memref<8x1xf32, #tpu.memory_space<vmem>>, %arg5: memref<24x24xf32, #tpu.memory_space<vmem>>, %arg6: memref<8x1xf32, #tpu.memory_space<vmem>>, %arg7: memref<24x24xf32, #tpu.memory_space<vmem>>, %arg8: memref<8x1xf32, #tpu.memory_space<vmem>>, %arg9: memref<8x768xf32, #tpu.memory_space<vmem>>) attributes {dimension_semantics = [#tpu.dimension_semantics<arbitrary>], iteration_bounds = array<i64: 1>, scalar_prefetch = 0 : i64, scratch_operands = 0 : i64, tpu.core_type = #tpu.core_type<tc>, window_params = [{pipeline_mode = #tpu.pipeline_mode<synchronous>, transform_indices = @transform_0, window_bounds = array<i64: 1, 768>}, {pipeline_mode = #tpu.pipeline_mode<synchronous>, transform_indices = @transform_1, window_bounds = array<i64: 8, 768>}, {pipeline_mode = #tpu.pipeline_mode<synchronous>, transform_indices = @transform_2, window_bounds = array<i64: 24, 24>}, {pipeline_mode = #tpu.pipeline_mode<synchronous>, transform_indices = @transform_3, window_bounds = array<i64: 8, 1>}, {pipeline_mode = #tpu.pipeline_mode<synchronous>, transform_indices = @transform_4, window_bounds = array<i64: 24, 24>}, {pipeline_mode = #tpu.pipeline_mode<synchronous>, transform_indices = @transform_5, window_bounds = array<i64: 8, 1>}, {pipeline_mode = #tpu.pipeline_mode<synchronous>, transform_indices = @transform_6, window_bounds = array<i64: 24, 24>}, {pipeline_mode = #tpu.pipeline_mode<synchronous>, transform_indices = @transform_7, window_bounds = array<i64: 8, 1>}, {pipeline_mode = #tpu.pipeline_mode<synchronous>, transform_indices = @transform_8, window_bounds = array<i64: 8, 768>}]} {
    %c0 = arith.constant 0 : index
    %c0_0 = arith.constant 0 : index
    %0 = vector.load %arg1[%c0, %c0_0] : memref<1x768xf32, #tpu.memory_space<vmem>>, vector<1x768xf32>
    %c0_1 = arith.constant 0 : index
    %c0_2 = arith.constant 0 : index
    %1 = vector.load %arg2[%c0_1, %c0_2] : memref<8x768xf32, #tpu.memory_space<vmem>>, vector<8x768xf32>
    %c18_i32 = arith.constant 18 : i32
    %2 = tpu.dynamic_rotate %1 by %c18_i32 dim 1 : vector<8x768xf32>, i32 -> vector<8x768xf32>
    %c750_i32 = arith.constant 750 : i32
    %3 = tpu.dynamic_rotate %1 by %c750_i32 dim 1 : vector<8x768xf32>, i32 -> vector<8x768xf32>
    %4 = tpu.concatenate %2, %1, %3 in 0 : vector<8x768xf32>, vector<8x768xf32>, vector<8x768xf32> -> vector<24x768xf32>
    %c0_3 = arith.constant 0 : index
    %c0_4 = arith.constant 0 : index
    %5 = vector.load %arg3[%c0_3, %c0_4] : memref<24x24xf32, #tpu.memory_space<vmem>>, vector<24x24xf32>
    %cst = arith.constant dense<0.000000e+00> : vector<24x768xf32>
    %6 = tpu.matmul %5, %4, %cst {dimension_numbers = #tpu.dot_dimension_numbers<[1], [0], [0], [1], [0, 0, 1, 1], [], []>} : vector<24x24xf32>, vector<24x768xf32>, vector<24x768xf32> -> vector<24x768xf32>
    %7 = vector.extract_strided_slice %6 {offsets = [8, 0], sizes = [8, 768], strides = [1, 1]} : vector<24x768xf32> to vector<8x768xf32>
    %8 = vector.extract_strided_slice %6 {offsets = [0, 0], sizes = [8, 768], strides = [1, 1]} : vector<24x768xf32> to vector<8x768xf32>
    %c1_i32 = arith.constant 1 : i32
    %9 = tpu.dynamic_rotate %8 by %c1_i32 dim 1 : vector<8x768xf32>, i32 -> vector<8x768xf32>
    %10 = arith.addf %7, %9 : vector<8x768xf32>
    %11 = vector.extract_strided_slice %6 {offsets = [16, 0], sizes = [8, 768], strides = [1, 1]} : vector<24x768xf32> to vector<8x768xf32>
    %c767_i32 = arith.constant 767 : i32
    %12 = tpu.dynamic_rotate %11 by %c767_i32 dim 1 : vector<8x768xf32>, i32 -> vector<8x768xf32>
    %13 = arith.addf %10, %12 : vector<8x768xf32>
    %c0_5 = arith.constant 0 : index
    %c0_6 = arith.constant 0 : index
    %14 = vector.load %arg4[%c0_5, %c0_6] : memref<8x1xf32, #tpu.memory_space<vmem>>, vector<8x1xf32>
    %15 = vector.broadcast %14 : vector<8x1xf32> to vector<8x768xf32>
    %16 = arith.addf %13, %15 : vector<8x768xf32>
    %cst_7 = arith.constant 2.000000e-01 : f32
    %17 = vector.broadcast %cst_7 : f32 to vector<8x768xf32>
    %18 = arith.mulf %17, %16 : vector<8x768xf32>
    %19 = arith.maximumf %16, %18 : vector<8x768xf32>
    %20 = vector.broadcast %0 : vector<1x768xf32> to vector<8x768xf32>
    %21 = arith.mulf %19, %20 : vector<8x768xf32>
    %c18_i32_8 = arith.constant 18 : i32
    %22 = tpu.dynamic_rotate %21 by %c18_i32_8 dim 1 : vector<8x768xf32>, i32 -> vector<8x768xf32>
    %c750_i32_9 = arith.constant 750 : i32
    %23 = tpu.dynamic_rotate %21 by %c750_i32_9 dim 1 : vector<8x768xf32>, i32 -> vector<8x768xf32>
    %24 = tpu.concatenate %22, %21, %23 in 0 : vector<8x768xf32>, vector<8x768xf32>, vector<8x768xf32> -> vector<24x768xf32>
    %c0_10 = arith.constant 0 : index
    %c0_11 = arith.constant 0 : index
    %25 = vector.load %arg5[%c0_10, %c0_11] : memref<24x24xf32, #tpu.memory_space<vmem>>, vector<24x24xf32>
    %cst_12 = arith.constant dense<0.000000e+00> : vector<24x768xf32>
    %26 = tpu.matmul %25, %24, %cst_12 {dimension_numbers = #tpu.dot_dimension_numbers<[1], [0], [0], [1], [0, 0, 1, 1], [], []>} : vector<24x24xf32>, vector<24x768xf32>, vector<24x768xf32> -> vector<24x768xf32>
    %27 = vector.extract_strided_slice %26 {offsets = [8, 0], sizes = [8, 768], strides = [1, 1]} : vector<24x768xf32> to vector<8x768xf32>
    %28 = vector.extract_strided_slice %26 {offsets = [0, 0], sizes = [8, 768], strides = [1, 1]} : vector<24x768xf32> to vector<8x768xf32>
    %c1_i32_13 = arith.constant 1 : i32
    %29 = tpu.dynamic_rotate %28 by %c1_i32_13 dim 1 : vector<8x768xf32>, i32 -> vector<8x768xf32>
    %30 = arith.addf %27, %29 : vector<8x768xf32>
    %31 = vector.extract_strided_slice %26 {offsets = [16, 0], sizes = [8, 768], strides = [1, 1]} : vector<24x768xf32> to vector<8x768xf32>
    %c767_i32_14 = arith.constant 767 : i32
    %32 = tpu.dynamic_rotate %31 by %c767_i32_14 dim 1 : vector<8x768xf32>, i32 -> vector<8x768xf32>
    %33 = arith.addf %30, %32 : vector<8x768xf32>
    %c0_15 = arith.constant 0 : index
    %c0_16 = arith.constant 0 : index
    %34 = vector.load %arg6[%c0_15, %c0_16] : memref<8x1xf32, #tpu.memory_space<vmem>>, vector<8x1xf32>
    %35 = vector.broadcast %34 : vector<8x1xf32> to vector<8x768xf32>
    %36 = arith.addf %33, %35 : vector<8x768xf32>
    %cst_17 = arith.constant 2.000000e-01 : f32
    %37 = vector.broadcast %cst_17 : f32 to vector<8x768xf32>
    %38 = arith.mulf %37, %36 : vector<8x768xf32>
    %39 = arith.maximumf %36, %38 : vector<8x768xf32>
    %40 = vector.broadcast %0 : vector<1x768xf32> to vector<8x768xf32>
    %41 = arith.mulf %39, %40 : vector<8x768xf32>
    %c18_i32_18 = arith.constant 18 : i32
    %42 = tpu.dynamic_rotate %41 by %c18_i32_18 dim 1 : vector<8x768xf32>, i32 -> vector<8x768xf32>
    %c750_i32_19 = arith.constant 750 : i32
    %43 = tpu.dynamic_rotate %41 by %c750_i32_19 dim 1 : vector<8x768xf32>, i32 -> vector<8x768xf32>
    %44 = tpu.concatenate %42, %41, %43 in 0 : vector<8x768xf32>, vector<8x768xf32>, vector<8x768xf32> -> vector<24x768xf32>
    %c0_20 = arith.constant 0 : index
    %c0_21 = arith.constant 0 : index
    %45 = vector.load %arg7[%c0_20, %c0_21] : memref<24x24xf32, #tpu.memory_space<vmem>>, vector<24x24xf32>
    %cst_22 = arith.constant dense<0.000000e+00> : vector<24x768xf32>
    %46 = tpu.matmul %45, %44, %cst_22 {dimension_numbers = #tpu.dot_dimension_numbers<[1], [0], [0], [1], [0, 0, 1, 1], [], []>} : vector<24x24xf32>, vector<24x768xf32>, vector<24x768xf32> -> vector<24x768xf32>
    %47 = vector.extract_strided_slice %46 {offsets = [8, 0], sizes = [8, 768], strides = [1, 1]} : vector<24x768xf32> to vector<8x768xf32>
    %48 = vector.extract_strided_slice %46 {offsets = [0, 0], sizes = [8, 768], strides = [1, 1]} : vector<24x768xf32> to vector<8x768xf32>
    %c1_i32_23 = arith.constant 1 : i32
    %49 = tpu.dynamic_rotate %48 by %c1_i32_23 dim 1 : vector<8x768xf32>, i32 -> vector<8x768xf32>
    %50 = arith.addf %47, %49 : vector<8x768xf32>
    %51 = vector.extract_strided_slice %46 {offsets = [16, 0], sizes = [8, 768], strides = [1, 1]} : vector<24x768xf32> to vector<8x768xf32>
    %c767_i32_24 = arith.constant 767 : i32
    %52 = tpu.dynamic_rotate %51 by %c767_i32_24 dim 1 : vector<8x768xf32>, i32 -> vector<8x768xf32>
    %53 = arith.addf %50, %52 : vector<8x768xf32>
    %c0_25 = arith.constant 0 : index
    %c0_26 = arith.constant 0 : index
    %54 = vector.load %arg8[%c0_25, %c0_26] : memref<8x1xf32, #tpu.memory_space<vmem>>, vector<8x1xf32>
    %55 = vector.broadcast %54 : vector<8x1xf32> to vector<8x768xf32>
    %56 = arith.addf %53, %55 : vector<8x768xf32>
    %cst_27 = arith.constant 2.000000e-01 : f32
    %57 = vector.broadcast %cst_27 : f32 to vector<8x768xf32>
    %58 = arith.mulf %57, %56 : vector<8x768xf32>
    %59 = arith.maximumf %56, %58 : vector<8x768xf32>
    %c0_28 = arith.constant 0 : index
    %c0_29 = arith.constant 0 : index
    %60 = vector.load %arg9[%c0_28, %c0_29] : memref<8x768xf32, #tpu.memory_space<vmem>>, vector<8x768xf32>
    tpu.vector_store %arg9[%c0_28, %c0_29], %59 {strides = array<i32>} : memref<8x768xf32, #tpu.memory_space<vmem>>, vector<8x768xf32>,
    return
  }
  func.func @transform_0(%arg0: i32) -> (i32, i32) {
    %c0_i32 = arith.constant 0 : i32
    %c0_i32_0 = arith.constant 0 : i32
    %c0_i32_1 = arith.constant 0 : i32
    return %c0_i32, %c0_i32_0 : i32, i32
  }
  func.func @transform_1(%arg0: i32) -> (i32, i32) {
    %c0_i32 = arith.constant 0 : i32
    %c0_i32_0 = arith.constant 0 : i32
    %c0_i32_1 = arith.constant 0 : i32
    return %c0_i32, %c0_i32_0 : i32, i32
  }
  func.func @transform_2(%arg0: i32) -> (i32, i32) {
    %c0_i32 = arith.constant 0 : i32
    %c0_i32_0 = arith.constant 0 : i32
    %c0_i32_1 = arith.constant 0 : i32
    return %c0_i32, %c0_i32_0 : i32, i32
  }
  func.func @transform_3(%arg0: i32) -> (i32, i32) {
    %c0_i32 = arith.constant 0 : i32
    %c0_i32_0 = arith.constant 0 : i32
    %c0_i32_1 = arith.constant 0 : i32
    return %c0_i32, %c0_i32_0 : i32, i32
  }
  func.func @transform_4(%arg0: i32) -> (i32, i32) {
    %c0_i32 = arith.constant 0 : i32
    %c0_i32_0 = arith.constant 0 : i32
    %c0_i32_1 = arith.constant 0 : i32
    return %c0_i32, %c0_i32_0 : i32, i32
  }
  func.func @transform_5(%arg0: i32) -> (i32, i32) {
    %c0_i32 = arith.constant 0 : i32
    %c0_i32_0 = arith.constant 0 : i32
    %c0_i32_1 = arith.constant 0 : i32
    return %c0_i32, %c0_i32_0 : i32, i32
  }
  func.func @transform_6(%arg0: i32) -> (i32, i32) {
    %c0_i32 = arith.constant 0 : i32
    %c0_i32_0 = arith.constant 0 : i32
    %c0_i32_1 = arith.constant 0 : i32
    return %c0_i32, %c0_i32_0 : i32, i32
  }
  func.func @transform_7(%arg0: i32) -> (i32, i32) {
    %c0_i32 = arith.constant 0 : i32
    %c0_i32_0 = arith.constant 0 : i32
    %c0_i32_1 = arith.constant 0 : i32
    return %c0_i32, %c0_i32_0 : i32, i32
  }
  func.func @transform_8(%arg0: i32) -> (i32, i32) {
    %c0_i32 = arith.constant 0 : i32
    %c0_i32_0 = arith.constant 0 : i32
    %c0_i32_1 = arith.constant 0 : i32
    return %c0_i32, %c0_i32_0 : i32, i32
  }
}

</mosaic_0001>

<llo_original>
// kernel: tpu_custom_call.1
$region0: #{tpu_custom_call.1}
  #allocation0 [shape = 'u32[]', space=smem, size = 0x4, offset = 0x4, fixed_abs, tag = 'smem constant byte address 0x4 - core index']
  #allocation1 [shape = 'u32[144,128]{1,0:T(1,128)}', space=vmem, size = 0x12000, scoped, tag = 'internal scratch']
  %s0 = inlined_call_operand.vmem [shape: f32[1,768], index: 0, kind: input, shape index: {}]
  %s1 = inlined_call_operand.hbm [shape: f32[8,768], index: 1, kind: input, shape index: {}]
  %s2 = inlined_call_operand.vmem [shape: f32[24,24], index: 2, kind: input, shape index: {}]
  %s3 = inlined_call_operand.vmem [shape: f32[8,1], index: 3, kind: input, shape index: {}]
  %s4 = inlined_call_operand.hbm [shape: f32[24,24], index: 4, kind: input, shape index: {}]
  %s5 = inlined_call_operand.vmem [shape: f32[8,1], index: 5, kind: input, shape index: {}]
  %s6 = inlined_call_operand.hbm [shape: f32[24,24], index: 6, kind: input, shape index: {}]
  %s7 = inlined_call_operand.vmem [shape: f32[8,1], index: 7, kind: input, shape index: {}]
  %s8 = inlined_call_operand.hbm [shape: f32[8,768], index: 8, kind: output, shape index: {}]
  %s9 = sld [smem:[#allocation0]]
  $region54: #{tpu_custom_call.1} parent=0
    _
  %s11 = ssub.s32 1, %s9
  %s12 = scalar_select 0, %s11, %s9
  $region1: #{tpu_custom_call.1} parent=0
    #allocation2 [shape = 'u8[24576]{0}', space=vmem, size = 0x6000, scoped, tag = 'input window, operand 1, single buffered']
    #allocation3 [shape = 's32[1]{0}', space=sflag, size = 0x4, scoped, tag = 'scoped memory for tpu_custom_call.1']
    #allocation4 [shape = 's32[1]{0}', space=sflag, size = 0x4, scoped, tag = 'scoped memory for tpu_custom_call.1']
    #allocation5 [shape = 'u8[12288]{0}', space=vmem, size = 0x3000, scoped, tag = 'input window, operand 4, single buffered']
    #allocation6 [shape = 's32[1]{0}', space=sflag, size = 0x4, scoped, tag = 'scoped memory for tpu_custom_call.1']
    #allocation7 [shape = 'u8[12288]{0}', space=vmem, size = 0x3000, scoped, tag = 'input window, operand 6, single buffered']
    #allocation8 [shape = 'u8[24576]{0}', space=vmem, size = 0x6000, scoped, tag = 'output window, operand 0, single buffered']
    %13 = vsyncpa [#allocation3], 0
    %14 = vsyncpa [#allocation6], 0
    %15 = vsyncpa [#allocation4], 0
    // Predicated region
    $region2: #{tpu_custom_call.1} parent=1 // pred_check
      _
    $region3: #{tpu_custom_call.1} parent=1 // pred_check_branch
      %17 = sbr.rel (0) target = $region5
    $region4: #{tpu_custom_call.1} parent=1 // pred_region
      _
    $region5: #{tpu_custom_call.1} parent=1 // pred_fallthru
      _
    // Predicated region
    $region6: #{tpu_custom_call.1} parent=1 // pred_check
      _
    $region7: #{tpu_custom_call.1} parent=1 // pred_check_branch
      %19 = sbr.rel (0) target = $region9
    $region8: #{tpu_custom_call.1} parent=1 // pred_region
      %s21 = ssub.s32 768, 768
      %22 = vsyncadd [#allocation3], %s21
      %s24 = sshll.u32 [#allocation2], 4
      %s25 = int_to_ptr.vmem [resolvable:$true] %s24
      %27 = dma.hbm_to_vmem [thread:$0]  %s1, 768, %s25, [#allocation3]
    $region9: #{tpu_custom_call.1} parent=1 // pred_fallthru
      _
    // Predicated region
    $region10: #{tpu_custom_call.1} parent=1 // pred_check
      _
    $region11: #{tpu_custom_call.1} parent=1 // pred_check_branch
      %29 = sbr.rel (0) target = $region13
    $region12: #{tpu_custom_call.1} parent=1 // pred_region
      _
    $region13: #{tpu_custom_call.1} parent=1 // pred_fallthru
      _
    // Predicated region
    $region14: #{tpu_custom_call.1} parent=1 // pred_check
      _
    $region15: #{tpu_custom_call.1} parent=1 // pred_check_branch
      %31 = sbr.rel (0) target = $region17
    $region16: #{tpu_custom_call.1} parent=1 // pred_region
      _
    $region17: #{tpu_custom_call.1} parent=1 // pred_fallthru
      _
    // Predicated region
    $region18: #{tpu_custom_call.1} parent=1 // pred_check
      _
    $region19: #{tpu_custom_call.1} parent=1 // pred_check_branch
      %33 = sbr.rel (0) target = $region21
    $region20: #{tpu_custom_call.1} parent=1 // pred_region
      %s35 = ssub.s32 384, 384
      %36 = vsyncadd [#allocation6], %s35
      %s37 = sshll.u32 [#allocation5], 4
      %s38 = int_to_ptr.vmem [resolvable:$true] %s37
      %43 = dma.hbm_to_vmem [thread:$0]  %s4, 384, %s38, [#allocation6], 128, 128, 8
    $region21: #{tpu_custom_call.1} parent=1 // pred_fallthru
      _
    // Predicated region
    $region22: #{tpu_custom_call.1} parent=1 // pred_check
      _
    $region23: #{tpu_custom_call.1} parent=1 // pred_check_branch
      %45 = sbr.rel (0) target = $region25
    $region24: #{tpu_custom_call.1} parent=1 // pred_region
      _
    $region25: #{tpu_custom_call.1} parent=1 // pred_fallthru
      _
    // Predicated region
    $region26: #{tpu_custom_call.1} parent=1 // pred_check
      _
    $region27: #{tpu_custom_call.1} parent=1 // pred_check_branch
      %47 = sbr.rel (0) target = $region29
    $region28: #{tpu_custom_call.1} parent=1 // pred_region
      %s49 = ssub.s32 384, 384
      %50 = vsyncadd [#allocation6], %s49
      %s51 = sshll.u32 [#allocation7], 4
      %s52 = int_to_ptr.vmem [resolvable:$true] %s51
      %57 = dma.hbm_to_vmem [thread:$0]  %s6, 384, %s52, [#allocation6], 128, 128, 8
    $region29: #{tpu_custom_call.1} parent=1 // pred_fallthru
      _
    // Predicated region
    $region30: #{tpu_custom_call.1} parent=1 // pred_check
      _
    $region31: #{tpu_custom_call.1} parent=1 // pred_check_branch
      %59 = sbr.rel (0) target = $region33
    $region32: #{tpu_custom_call.1} parent=1 // pred_region
      _
    $region33: #{tpu_custom_call.1} parent=1 // pred_fallthru
      _
    // Predicated region
    $region34: #{tpu_custom_call.1} parent=1 // pred_check
      _
    $region35: #{tpu_custom_call.1} parent=1 // pred_check_branch
      %61 = sbr.rel (0) target = $region37
    $region36: #{tpu_custom_call.1} parent=1 // pred_region
      %62 = dma.done [#allocation3], 768
    $region37: #{tpu_custom_call.1} parent=1 // pred_fallthru
      _
    // Predicated region
    $region38: #{tpu_custom_call.1} parent=1 // pred_check
      _
    $region39: #{tpu_custom_call.1} parent=1 // pred_check_branch
      %64 = sbr.rel (0) target = $region41
    $region40: #{tpu_custom_call.1} parent=1 // pred_region
      %65 = dma.done [#allocation6], 384
    $region41: #{tpu_custom_call.1} parent=1 // pred_fallthru
      _
    // Predicated region
    $region42: #{tpu_custom_call.1} parent=1 // pred_check
      _
    $region43: #{tpu_custom_call.1} parent=1 // pred_check_branch
      %67 = sbr.rel (0) target = $region45
    $region44: #{tpu_custom_call.1} parent=1 // pred_region
      %68 = dma.done [#allocation6], 384
    $region45: #{tpu_custom_call.1} parent=1 // pred_fallthru
      _
    %v69 = vld [vmem:[%s0] sm:$0x3f]
    %v70 = vld [vmem:[#allocation2] sm:$0xff]
    %v71 = vld [vmem:[#allocation2 + $0x8] sm:$0xff]
    %v72 = vld [vmem:[#allocation2 + $0x10] sm:$0xff]
    %v73 = vld [vmem:[#allocation2 + $0x18] sm:$0xff]
    %v74 = vld [vmem:[#allocation2 + $0x20] sm:$0xff]
    %v75 = vld [vmem:[#allocation2 + $0x28] sm:$0xff]
    %76 = vrot.lane.b32.xlu0 %v70, 18
    %v77 = vpop.permute.xlu0 %76
    %78 = vrot.lane.b32.xlu0 %v71, 18
    %v79 = vpop.permute.xlu0 %78
    %80 = vrot.lane.b32.xlu0 %v72, 18
    %v81 = vpop.permute.xlu0 %80
    %82 = vrot.lane.b32.xlu0 %v73, 18
    %v83 = vpop.permute.xlu0 %82
    %84 = vrot.lane.b32.xlu0 %v74, 18
    %v85 = vpop.permute.xlu0 %84
    %86 = vrot.lane.b32.xlu0 %v75, 18
    %v87 = vpop.permute.xlu0 %86
    %v88 = vlaneseq
    %v89 = vand.u32 %v88, 127
    %vm90 = vcmp.lt.s32.totalorder %v89, 18
    %v91 = vsel %vm90, %v85, %v87
    %v92 = vsel %vm90, %v83, %v85
    %v93 = vsel %vm90, %v81, %v83
    %v94 = vsel %vm90, %v79, %v81
    %v95 = vsel %vm90, %v77, %v79
    %v96 = vsel %vm90, %v87, %v77
    %97 = vrot.lane.b32.xlu0 %v70, 110
    %v98 = vpop.permute.xlu0 %97
    %99 = vrot.lane.b32.xlu0 %v71, 110
    %v100 = vpop.permute.xlu0 %99
    %101 = vrot.lane.b32.xlu0 %v72, 110
    %v102 = vpop.permute.xlu0 %101
    %103 = vrot.lane.b32.xlu0 %v73, 110
    %v104 = vpop.permute.xlu0 %103
    %105 = vrot.lane.b32.xlu0 %v74, 110
    %v106 = vpop.permute.xlu0 %105
    %107 = vrot.lane.b32.xlu0 %v75, 110
    %v108 = vpop.permute.xlu0 %107
    %vm109 = vcmp.lt.s32.totalorder %v89, 110
    %v110 = vsel %vm109, %v106, %v108
    %v111 = vsel %vm109, %v104, %v106
    %v112 = vsel %vm109, %v102, %v104
    %v113 = vsel %vm109, %v100, %v102
    %v114 = vsel %vm109, %v98, %v100
    %v115 = vsel %vm109, %v108, %v98
    %v116 = vld [vmem:[%s2] sm:$0xff]
    %v117 = vld [vmem:[%s2 + $0x8] sm:$0xff]
    %v118 = vld [vmem:[%s2 + $0x10] sm:$0xff]
    %vm119 = vcmask 195584
    %v121 = vsel %vm119, %v116, 0
    %v124 = vsel %vm119, %v117, 0
    %v127 = vsel %vm119, %v118, 0
    %129 = vmatprep.subr.mxu0 0.0
    %130 = vmatpush1.msra.mxu0 0.0
    %131 = vmatprep.subr.mxu0 0.0
    %132 = vmatpush1.msra.mxu0 0.0
    %133 = vmatprep.subr.mxu0 0.0
    %134 = vmatpush1.msra.mxu0 0.0
    %135 = vmatprep.subr.mxu0 0.0
    %136 = vmatpush1.msra.mxu0 0.0
    %137 = vmatprep.subr.mxu0 0.0
    %138 = vmatpush1.msra.mxu0 0.0
    %139 = vmatprep.subr.mxu0 0.0
    %140 = vmatpush1.msra.mxu0 0.0
    %141 = vmatprep.subr.mxu0 0.0
    %142 = vmatpush1.msra.mxu0 0.0
    %143 = vmatprep.subr.mxu0 0.0
    %144 = vmatpush1.msra.mxu0 0.0
    %145 = vmatprep.subr.mxu0 0.0
    %146 = vmatpush1.msra.mxu0 0.0
    %147 = vmatprep.subr.mxu0 0.0
    %148 = vmatpush1.msra.mxu0 0.0
    %149 = vmatprep.subr.mxu0 0.0
    %150 = vmatpush1.msra.mxu0 0.0
    %151 = vmatprep.subr.mxu0 0.0
    %152 = vmatpush1.msra.mxu0 0.0
    %153 = vmatprep.subr.mxu0 0.0
    %154 = vmatpush1.msra.mxu0 0.0
    %155 = vmatprep.subr.mxu0 %v113
    %156 = vmatpush1.msra.mxu0 %v114
    %157 = vmatprep.subr.mxu0 %v71
    %158 = vmatpush1.msra.mxu0 %v70
    %159 = vmatprep.subr.mxu0 %v95
    %160 = vmatpush1.msra.mxu0 %v96
    %161 = vmatprep.subr.mxu0 0.0
    %162 = vmatpush2.msra.mxu0 0.0
    %163 = vmatprep.subr.mxu0 0.0
    %164 = vmatpush2.msra.mxu0 0.0
    %165 = vmatprep.subr.mxu0 0.0
    %166 = vmatpush2.msra.mxu0 0.0
    %167 = vmatprep.subr.mxu0 0.0
    %168 = vmatpush2.msra.mxu0 0.0
    %169 = vmatprep.subr.mxu0 0.0
    %170 = vmatpush2.msra.mxu0 0.0
    %171 = vmatprep.subr.mxu0 0.0
    %172 = vmatpush2.msra.mxu0 0.0
    %173 = vmatprep.subr.mxu0 0.0
    %174 = vmatpush2.msra.mxu0 0.0
    %175 = vmatprep.subr.mxu0 0.0
    %176 = vmatpush2.msra.mxu0 0.0
    %177 = vmatprep.subr.mxu0 0.0
    %178 = vmatpush2.msra.mxu0 0.0
    %179 = vmatprep.subr.mxu0 0.0
    %180 = vmatpush2.msra.mxu0 0.0
    %181 = vmatprep.subr.mxu0 0.0
    %182 = vmatpush2.msra.mxu0 0.0
    %183 = vmatprep.subr.mxu0 0.0
    %184 = vmatpush2.msra.mxu0 0.0
    %185 = vmatprep.subr.mxu0 0.0
    %186 = vmatpush2.msra.mxu0 0.0
    %187 = vmatprep.subr.mxu0 0.0
    %188 = vmatpush2.msra.mxu0 0.0
    %189 = vmatprep.subr.mxu0 0.0
    %190 = vmatpush2.msra.mxu0 0.0
    %191 = vmatprep.subr.mxu0 0.0
    %192 = vmatpush2.msra.mxu0 0.0
    %193 = vmatprep.mubr.f32.mxu0 0.0
    %194 = vmatmul.mubr.f32.gmra.mxu0 %v121
    %v195 = vpop.f32.mrf.mxu0
    %v196 = vadd.f32 0.0, %v195
    %v197 = vpop.f32.mrf.mxu0
    %v198 = vadd.f32 0.0, %v197
    %199 = vmatprep.mubr.f32.mxu0 0.0
    %200 = vmatmul.mubr.f32.gmra.mxu0 %v124
    %v201 = vpop.f32.mrf.mxu0
    %v202 = vadd.f32 0.0, %v201
    %v203 = vpop.f32.mrf.mxu0
    %v204 = vadd.f32 0.0, %v203
    %205 = vmatprep.mubr.f32.mxu0 0.0
    %206 = vmatmul.mubr.f32.gmra.mxu0 %v127
    %v207 = vpop.f32.mrf.mxu0
    %v208 = vadd.f32 0.0, %v207
    %v209 = vpop.f32.mrf.mxu0
    %v210 = vadd.f32 0.0, %v209
    %211 = vdwg.mxu0
    %212 = vmatprep.subr.mxu0 0.0
    %213 = vmatpush1.msra.mxu0 0.0
    %214 = vmatprep.subr.mxu0 0.0
    %215 = vmatpush1.msra.mxu0 0.0
    %216 = vmatprep.subr.mxu0 0.0
    %217 = vmatpush1.msra.mxu0 0.0
    %218 = vmatprep.subr.mxu0 0.0
    %219 = vmatpush1.msra.mxu0 0.0
    %220 = vmatprep.subr.mxu0 0.0
    %221 = vmatpush1.msra.mxu0 0.0
    %222 = vmatprep.subr.mxu0 0.0
    %223 = vmatpush1.msra.mxu0 0.0
    %224 = vmatprep.subr.mxu0 0.0
    %225 = vmatpush1.msra.mxu0 0.0
    %226 = vmatprep.subr.mxu0 0.0
    %227 = vmatpush1.msra.mxu0 0.0
    %228 = vmatprep.subr.mxu0 0.0
    %229 = vmatpush1.msra.mxu0 0.0
    %230 = vmatprep.subr.mxu0 0.0
    %231 = vmatpush1.msra.mxu0 0.0
    %232 = vmatprep.subr.mxu0 0.0
    %233 = vmatpush1.msra.mxu0 0.0
    %234 = vmatprep.subr.mxu0 0.0
    %235 = vmatpush1.msra.mxu0 0.0
    %236 = vmatprep.subr.mxu0 0.0
    %237 = vmatpush1.msra.mxu0 0.0
    %238 = vmatprep.subr.mxu0 %v111
    %239 = vmatpush1.msra.mxu0 %v112
    %240 = vmatprep.subr.mxu0 %v73
    %241 = vmatpush1.msra.mxu0 %v72
    %242 = vmatprep.subr.mxu0 %v93
    %243 = vmatpush1.msra.mxu0 %v94
    %244 = vmatprep.subr.mxu0 0.0
    %245 = vmatpush2.msra.mxu0 0.0
    %246 = vmatprep.subr.mxu0 0.0
    %247 = vmatpush2.msra.mxu0 0.0
    %248 = vmatprep.subr.mxu0 0.0
    %249 = vmatpush2.msra.mxu0 0.0
    %250 = vmatprep.subr.mxu0 0.0
    %251 = vmatpush2.msra.mxu0 0.0
    %252 = vmatprep.subr.mxu0 0.0
    %253 = vmatpush2.msra.mxu0 0.0
    %254 = vmatprep.subr.mxu0 0.0
    %255 = vmatpush2.msra.mxu0 0.0
    %256 = vmatprep.subr.mxu0 0.0
    %257 = vmatpush2.msra.mxu0 0.0
    %258 = vmatprep.subr.mxu0 0.0
    %259 = vmatpush2.msra.mxu0 0.0
    %260 = vmatprep.subr.mxu0 0.0
    %261 = vmatpush2.msra.mxu0 0.0
    %262 = vmatprep.subr.mxu0 0.0
    %263 = vmatpush2.msra.mxu0 0.0
    %264 = vmatprep.subr.mxu0 0.0
    %265 = vmatpush2.msra.mxu0 0.0
    %266 = vmatprep.subr.mxu0 0.0
    %267 = vmatpush2.msra.mxu0 0.0
    %268 = vmatprep.subr.mxu0 0.0
    %269 = vmatpush2.msra.mxu0 0.0
    %270 = vmatprep.subr.mxu0 0.0
    %271 = vmatpush2.msra.mxu0 0.0
    %272 = vmatprep.subr.mxu0 0.0
    %273 = vmatpush2.msra.mxu0 0.0
    %274 = vmatprep.subr.mxu0 0.0
    %275 = vmatpush2.msra.mxu0 0.0
    %276 = vmatprep.mubr.f32.mxu0 0.0
    %277 = vmatmul.mubr.f32.gmra.mxu0 %v121
    %v278 = vpop.f32.mrf.mxu0
    %v279 = vadd.f32 0.0, %v278
    %v280 = vpop.f32.mrf.mxu0
    %v281 = vadd.f32 0.0, %v280
    %282 = vmatprep.mubr.f32.mxu0 0.0
    %283 = vmatmul.mubr.f32.gmra.mxu0 %v124
    %v284 = vpop.f32.mrf.mxu0
    %v285 = vadd.f32 0.0, %v284
    %v286 = vpop.f32.mrf.mxu0
    %v287 = vadd.f32 0.0, %v286
    %288 = vmatprep.mubr.f32.mxu0 0.0
    %289 = vmatmul.mubr.f32.gmra.mxu0 %v127
    %v290 = vpop.f32.mrf.mxu0
    %v291 = vadd.f32 0.0, %v290
    %v292 = vpop.f32.mrf.mxu0
    %v293 = vadd.f32 0.0, %v292
    %294 = vdwg.mxu0
    %295 = vmatprep.subr.mxu0 0.0
    %296 = vmatpush1.msra.mxu0 0.0
    %297 = vmatprep.subr.mxu0 0.0
    %298 = vmatpush1.msra.mxu0 0.0
    %299 = vmatprep.subr.mxu0 0.0
    %300 = vmatpush1.msra.mxu0 0.0
    %301 = vmatprep.subr.mxu0 0.0
    %302 = vmatpush1.msra.mxu0 0.0
    %303 = vmatprep.subr.mxu0 0.0
    %304 = vmatpush1.msra.mxu0 0.0
    %305 = vmatprep.subr.mxu0 0.0
    %306 = vmatpush1.msra.mxu0 0.0
    %307 = vmatprep.subr.mxu0 0.0
    %308 = vmatpush1.msra.mxu0 0.0
    %309 = vmatprep.subr.mxu0 0.0
    %310 = vmatpush1.msra.mxu0 0.0
    %311 = vmatprep.subr.mxu0 0.0
    %312 = vmatpush1.msra.mxu0 0.0
    %313 = vmatprep.subr.mxu0 0.0
    %314 = vmatpush1.msra.mxu0 0.0
    %315 = vmatprep.subr.mxu0 0.0
    %316 = vmatpush1.msra.mxu0 0.0
    %317 = vmatprep.subr.mxu0 0.0
    %318 = vmatpush1.msra.mxu0 0.0
    %319 = vmatprep.subr.mxu0 0.0
    %320 = vmatpush1.msra.mxu0 0.0
    %321 = vmatprep.subr.mxu0 %v115
    %322 = vmatpush1.msra.mxu0 %v110
    %323 = vmatprep.subr.mxu0 %v75
    %324 = vmatpush1.msra.mxu0 %v74
    %325 = vmatprep.subr.mxu0 %v91
    %326 = vmatpush1.msra.mxu0 %v92
    %327 = vmatprep.subr.mxu0 0.0
    %328 = vmatpush2.msra.mxu0 0.0
    %329 = vmatprep.subr.mxu0 0.0
    %330 = vmatpush2.msra.mxu0 0.0
    %331 = vmatprep.subr.mxu0 0.0
    %332 = vmatpush2.msra.mxu0 0.0
    %333 = vmatprep.subr.mxu0 0.0
    %334 = vmatpush2.msra.mxu0 0.0
    %335 = vmatprep.subr.mxu0 0.0
    %336 = vmatpush2.msra.mxu0 0.0
    %337 = vmatprep.subr.mxu0 0.0
    %338 = vmatpush2.msra.mxu0 0.0
    %339 = vmatprep.subr.mxu0 0.0
    %340 = vmatpush2.msra.mxu0 0.0
    %341 = vmatprep.subr.mxu0 0.0
    %342 = vmatpush2.msra.mxu0 0.0
    %343 = vmatprep.subr.mxu0 0.0
    %344 = vmatpush2.msra.mxu0 0.0
    %345 = vmatprep.subr.mxu0 0.0
    %346 = vmatpush2.msra.mxu0 0.0
    %347 = vmatprep.subr.mxu0 0.0
    %348 = vmatpush2.msra.mxu0 0.0
    %349 = vmatprep.subr.mxu0 0.0
    %350 = vmatpush2.msra.mxu0 0.0
    %351 = vmatprep.subr.mxu0 0.0
    %352 = vmatpush2.msra.mxu0 0.0
    %353 = vmatprep.subr.mxu0 0.0
    %354 = vmatpush2.msra.mxu0 0.0
    %355 = vmatprep.subr.mxu0 0.0
    %356 = vmatpush2.msra.mxu0 0.0
    %357 = vmatprep.subr.mxu0 0.0
    %358 = vmatpush2.msra.mxu0 0.0
    %359 = vmatprep.mubr.f32.mxu0 0.0
    %360 = vmatmul.mubr.f32.gmra.mxu0 %v121
    %v361 = vpop.f32.mrf.mxu0
    %v362 = vadd.f32 0.0, %v361
    %v363 = vpop.f32.mrf.mxu0
    %v364 = vadd.f32 0.0, %v363
    %365 = vmatprep.mubr.f32.mxu0 0.0
    %366 = vmatmul.mubr.f32.gmra.mxu0 %v124
    %v367 = vpop.f32.mrf.mxu0
    %v368 = vadd.f32 0.0, %v367
    %v369 = vpop.f32.mrf.mxu0
    %v370 = vadd.f32 0.0, %v369
    %371 = vmatprep.mubr.f32.mxu0 0.0
    %372 = vmatmul.mubr.f32.gmra.mxu0 %v127
    %v373 = vpop.f32.mrf.mxu0
    %v374 = vadd.f32 0.0, %v373
    %v375 = vpop.f32.mrf.mxu0
    %v376 = vadd.f32 0.0, %v375
    %377 = vdwg.mxu0
    %378 = vrot.lane.b32.xlu0 %v196, 1
    %v379 = vpop.permute.xlu0 %378
    %380 = vrot.lane.b32.xlu0 %v198, 1
    %v381 = vpop.permute.xlu0 %380
    %382 = vrot.lane.b32.xlu0 %v279, 1
    %v383 = vpop.permute.xlu0 %382
    %384 = vrot.lane.b32.xlu0 %v281, 1
    %v385 = vpop.permute.xlu0 %384
    %386 = vrot.lane.b32.xlu0 %v362, 1
    %v387 = vpop.permute.xlu0 %386
    %388 = vrot.lane.b32.xlu0 %v364, 1
    %v389 = vpop.permute.xlu0 %388
    %vm390 = vcmp.lt.s32.totalorder %v89, 1
    %v391 = vsel %vm390, %v387, %v389
    %v392 = vsel %vm390, %v385, %v387
    %v393 = vsel %vm390, %v383, %v385
    %v394 = vsel %vm390, %v381, %v383
    %v395 = vsel %vm390, %v379, %v381
    %v396 = vsel %vm390, %v389, %v379
    %v397 = vadd.f32 %v202, %v396
    %v398 = vadd.f32 %v204, %v395
    %v399 = vadd.f32 %v285, %v394
    %v400 = vadd.f32 %v287, %v393
    %v401 = vadd.f32 %v368, %v392
    %v402 = vadd.f32 %v370, %v391
    %403 = vrot.lane.b32.xlu0 %v208, 127
    %v404 = vpop.permute.xlu0 %403
    %405 = vrot.lane.b32.xlu0 %v210, 127
    %v406 = vpop.permute.xlu0 %405
    %407 = vrot.lane.b32.xlu0 %v291, 127
    %v408 = vpop.permute.xlu0 %407
    %409 = vrot.lane.b32.xlu0 %v293, 127
    %v410 = vpop.permute.xlu0 %409
    %411 = vrot.lane.b32.xlu0 %v374, 127
    %v412 = vpop.permute.xlu0 %411
    %413 = vrot.lane.b32.xlu0 %v376, 127
    %v414 = vpop.permute.xlu0 %413
    %vm415 = vcmp.lt.s32.totalorder %v89, 127
    %v416 = vsel %vm415, %v412, %v414
    %v417 = vsel %vm415, %v410, %v412
    %v418 = vsel %vm415, %v408, %v410
    %v419 = vsel %vm415, %v406, %v408
    %v420 = vsel %vm415, %v404, %v406
    %v421 = vsel %vm415, %v414, %v404
    %v422 = vadd.f32 %v397, %v420
    %v423 = vadd.f32 %v398, %v419
    %v424 = vadd.f32 %v399, %v418
    %v425 = vadd.f32 %v400, %v417
    %v426 = vadd.f32 %v401, %v416
    %v427 = vadd.f32 %v402, %v421
    %v428 = vld [vmem:[%s3] sm:$0xff]
    %430 = vset.pattern.permute.xlu0 0
    %431 = vperm.xlu0 %430, %v428
    %v432 = vpop.permute.xlu0 %431
    %v434 = vadd.f32 %v422, %v432
    %v435 = vadd.f32 %v423, %v432
    %v436 = vadd.f32 %v424, %v432
    %v437 = vadd.f32 %v425, %v432
    %v438 = vadd.f32 %v426, %v432
    %v439 = vadd.f32 %v427, %v432
    %v440 = vmul.f32 %v434, 0.2
    %v441 = vmul.f32 %v435, 0.2
    %v442 = vmul.f32 %v436, 0.2
    %v443 = vmul.f32 %v437, 0.2
    %v444 = vmul.f32 %v438, 0.2
    %v445 = vmul.f32 %v439, 0.2
    %v446 = vmax.f32 %v434, %v440
    %v447 = vmax.f32 %v435, %v441
    %v448 = vmax.f32 %v436, %v442
    %v449 = vmax.f32 %v437, %v443
    %v450 = vmax.f32 %v438, %v444
    %v451 = vmax.f32 %v439, %v445
    %v453 = vlaneseq
    %v454 = vshrl.u32 %v453, 7
    %v455 = vsub.s32 0, %v454
    %v456 = vrot.slane %v69, %v455
    %v457 = vlaneseq
    %v458 = vshrl.u32 %v457, 7
    %v459 = vsub.s32 1, %v458
    %v460 = vrot.slane %v69, %v459
    %v461 = vlaneseq
    %v462 = vshrl.u32 %v461, 7
    %v463 = vsub.s32 2, %v462
    %v464 = vrot.slane %v69, %v463
    %v465 = vlaneseq
    %v466 = vshrl.u32 %v465, 7
    %v467 = vsub.s32 3, %v466
    %v468 = vrot.slane %v69, %v467
    %v469 = vlaneseq
    %v470 = vshrl.u32 %v469, 7
    %v471 = vsub.s32 4, %v470
    %v472 = vrot.slane %v69, %v471
    %v473 = vlaneseq
    %v474 = vshrl.u32 %v473, 7
    %v475 = vsub.s32 5, %v474
    %v476 = vrot.slane %v69, %v475
    %v483 = vmul.f32 %v446, %v456
    %v484 = vmul.f32 %v447, %v460
    %v485 = vmul.f32 %v448, %v464
    %v486 = vmul.f32 %v449, %v468
    %v487 = vmul.f32 %v450, %v472
    %v488 = vmul.f32 %v451, %v476
    %489 = vrot.lane.b32.xlu0 %v483, 18
    %v490 = vpop.permute.xlu0 %489
    %491 = vrot.lane.b32.xlu0 %v484, 18
    %v492 = vpop.permute.xlu0 %491
    %493 = vrot.lane.b32.xlu0 %v485, 18
    %v494 = vpop.permute.xlu0 %493
    %495 = vrot.lane.b32.xlu0 %v486, 18
    %v496 = vpop.permute.xlu0 %495
    %497 = vrot.lane.b32.xlu0 %v487, 18
    %v498 = vpop.permute.xlu0 %497
    %499 = vrot.lane.b32.xlu0 %v488, 18
    %v500 = vpop.permute.xlu0 %499
    %v501 = vsel %vm90, %v498, %v500
    %v502 = vsel %vm90, %v496, %v498
    %v503 = vsel %vm90, %v494, %v496
    %v504 = vsel %vm90, %v492, %v494
    %v505 = vsel %vm90, %v490, %v492
    %v506 = vsel %vm90, %v500, %v490
    %507 = vrot.lane.b32.xlu0 %v483, 110
    %v508 = vpop.permute.xlu0 %507
    %509 = vrot.lane.b32.xlu0 %v484, 110
    %v510 = vpop.permute.xlu0 %509
    %511 = vrot.lane.b32.xlu0 %v485, 110
    %v512 = vpop.permute.xlu0 %511
    %513 = vrot.lane.b32.xlu0 %v486, 110
    %v514 = vpop.permute.xlu0 %513
    %515 = vrot.lane.b32.xlu0 %v487, 110
    %v516 = vpop.permute.xlu0 %515
    %517 = vrot.lane.b32.xlu0 %v488, 110
    %v518 = vpop.permute.xlu0 %517
    %v519 = vsel %vm109, %v516, %v518
    %v520 = vsel %vm109, %v514, %v516
    %v521 = vsel %vm109, %v512, %v514
    %v522 = vsel %vm109, %v510, %v512
    %v523 = vsel %vm109, %v508, %v510
    %v524 = vsel %vm109, %v518, %v508
    %v525 = vld [vmem:[#allocation5] sm:$0xff]
    %v526 = vld [vmem:[#allocation5 + $0x8] sm:$0xff]
    %v527 = vld [vmem:[#allocation5 + $0x10] sm:$0xff]
    %v529 = vsel %vm119, %v525, 0
    %v532 = vsel %vm119, %v526, 0
    %v535 = vsel %vm119, %v527, 0
    %537 = vmatprep.subr.mxu0 0.0
    %538 = vmatpush1.msra.mxu0 0.0
    %539 = vmatprep.subr.mxu0 0.0
    %540 = vmatpush1.msra.mxu0 0.0
    %541 = vmatprep.subr.mxu0 0.0
    %542 = vmatpush1.msra.mxu0 0.0
    %543 = vmatprep.subr.mxu0 0.0
    %544 = vmatpush1.msra.mxu0 0.0
    %545 = vmatprep.subr.mxu0 0.0
    %546 = vmatpush1.msra.mxu0 0.0
    %547 = vmatprep.subr.mxu0 0.0
    %548 = vmatpush1.msra.mxu0 0.0
    %549 = vmatprep.subr.mxu0 0.0
    %550 = vmatpush1.msra.mxu0 0.0
    %551 = vmatprep.subr.mxu0 0.0
    %552 = vmatpush1.msra.mxu0 0.0
    %553 = vmatprep.subr.mxu0 0.0
    %554 = vmatpush1.msra.mxu0 0.0
    %555 = vmatprep.subr.mxu0 0.0
    %556 = vmatpush1.msra.mxu0 0.0
    %557 = vmatprep.subr.mxu0 0.0
    %558 = vmatpush1.msra.mxu0 0.0
    %559 = vmatprep.subr.mxu0 0.0
    %560 = vmatpush1.msra.mxu0 0.0
    %561 = vmatprep.subr.mxu0 0.0
    %562 = vmatpush1.msra.mxu0 0.0
    %563 = vmatprep.subr.mxu0 %v522
    %564 = vmatpush1.msra.mxu0 %v523
    %565 = vmatprep.subr.mxu0 %v484
    %566 = vmatpush1.msra.mxu0 %v483
    %567 = vmatprep.subr.mxu0 %v505
    %568 = vmatpush1.msra.mxu0 %v506
    %569 = vmatprep.subr.mxu0 0.0
    %570 = vmatpush2.msra.mxu0 0.0
    %571 = vmatprep.subr.mxu0 0.0
    %572 = vmatpush2.msra.mxu0 0.0
    %573 = vmatprep.subr.mxu0 0.0
    %574 = vmatpush2.msra.mxu0 0.0
    %575 = vmatprep.subr.mxu0 0.0
    %576 = vmatpush2.msra.mxu0 0.0
    %577 = vmatprep.subr.mxu0 0.0
    %578 = vmatpush2.msra.mxu0 0.0
    %579 = vmatprep.subr.mxu0 0.0
    %580 = vmatpush2.msra.mxu0 0.0
    %581 = vmatprep.subr.mxu0 0.0
    %582 = vmatpush2.msra.mxu0 0.0
    %583 = vmatprep.subr.mxu0 0.0
    %584 = vmatpush2.msra.mxu0 0.0
    %585 = vmatprep.subr.mxu0 0.0
    %586 = vmatpush2.msra.mxu0 0.0
    %587 = vmatprep.subr.mxu0 0.0
    %588 = vmatpush2.msra.mxu0 0.0
    %589 = vmatprep.subr.mxu0 0.0
    %590 = vmatpush2.msra.mxu0 0.0
    %591 = vmatprep.subr.mxu0 0.0
    %592 = vmatpush2.msra.mxu0 0.0
    %593 = vmatprep.subr.mxu0 0.0
    %594 = vmatpush2.msra.mxu0 0.0
    %595 = vmatprep.subr.mxu0 0.0
    %596 = vmatpush2.msra.mxu0 0.0
    %597 = vmatprep.subr.mxu0 0.0
    %598 = vmatpush2.msra.mxu0 0.0
    %599 = vmatprep.subr.mxu0 0.0
    %600 = vmatpush2.msra.mxu0 0.0
    %601 = vmatprep.mubr.f32.mxu0 0.0
    %602 = vmatmul.mubr.f32.gmra.mxu0 %v529
    %v603 = vpop.f32.mrf.mxu0
    %v604 = vadd.f32 0.0, %v603
    %v605 = vpop.f32.mrf.mxu0
    %v606 = vadd.f32 0.0, %v605
    %607 = vmatprep.mubr.f32.mxu0 0.0
    %608 = vmatmul.mubr.f32.gmra.mxu0 %v532
    %v609 = vpop.f32.mrf.mxu0
    %v610 = vadd.f32 0.0, %v609
    %v611 = vpop.f32.mrf.mxu0
    %v612 = vadd.f32 0.0, %v611
    %613 = vmatprep.mubr.f32.mxu0 0.0
    %614 = vmatmul.mubr.f32.gmra.mxu0 %v535
    %v615 = vpop.f32.mrf.mxu0
    %v616 = vadd.f32 0.0, %v615
    %v617 = vpop.f32.mrf.mxu0
    %v618 = vadd.f32 0.0, %v617
    %619 = vdwg.mxu0
    %620 = vmatprep.subr.mxu0 0.0
    %621 = vmatpush1.msra.mxu0 0.0
    %622 = vmatprep.subr.mxu0 0.0
    %623 = vmatpush1.msra.mxu0 0.0
    %624 = vmatprep.subr.mxu0 0.0
    %625 = vmatpush1.msra.mxu0 0.0
    %626 = vmatprep.subr.mxu0 0.0
    %627 = vmatpush1.msra.mxu0 0.0
    %628 = vmatprep.subr.mxu0 0.0
    %629 = vmatpush1.msra.mxu0 0.0
    %630 = vmatprep.subr.mxu0 0.0
    %631 = vmatpush1.msra.mxu0 0.0
    %632 = vmatprep.subr.mxu0 0.0
    %633 = vmatpush1.msra.mxu0 0.0
    %634 = vmatprep.subr.mxu0 0.0
    %635 = vmatpush1.msra.mxu0 0.0
    %636 = vmatprep.subr.mxu0 0.0
    %637 = vmatpush1.msra.mxu0 0.0
    %638 = vmatprep.subr.mxu0 0.0
    %639 = vmatpush1.msra.mxu0 0.0
    %640 = vmatprep.subr.mxu0 0.0
    %641 = vmatpush1.msra.mxu0 0.0
    %642 = vmatprep.subr.mxu0 0.0
    %643 = vmatpush1.msra.mxu0 0.0
    %644 = vmatprep.subr.mxu0 0.0
    %645 = vmatpush1.msra.mxu0 0.0
    %646 = vmatprep.subr.mxu0 %v520
    %647 = vmatpush1.msra.mxu0 %v521
    %648 = vmatprep.subr.mxu0 %v486
    %649 = vmatpush1.msra.mxu0 %v485
    %650 = vmatprep.subr.mxu0 %v503
    %651 = vmatpush1.msra.mxu0 %v504
    %652 = vmatprep.subr.mxu0 0.0
    %653 = vmatpush2.msra.mxu0 0.0
    %654 = vmatprep.subr.mxu0 0.0
    %655 = vmatpush2.msra.mxu0 0.0
    %656 = vmatprep.subr.mxu0 0.0
    %657 = vmatpush2.msra.mxu0 0.0
    %658 = vmatprep.subr.mxu0 0.0
    %659 = vmatpush2.msra.mxu0 0.0
    %660 = vmatprep.subr.mxu0 0.0
    %661 = vmatpush2.msra.mxu0 0.0
    %662 = vmatprep.subr.mxu0 0.0
    %663 = vmatpush2.msra.mxu0 0.0
    %664 = vmatprep.subr.mxu0 0.0
    %665 = vmatpush2.msra.mxu0 0.0
    %666 = vmatprep.subr.mxu0 0.0
    %667 = vmatpush2.msra.mxu0 0.0
    %668 = vmatprep.subr.mxu0 0.0
    %669 = vmatpush2.msra.mxu0 0.0
    %670 = vmatprep.subr.mxu0 0.0
    %671 = vmatpush2.msra.mxu0 0.0
    %672 = vmatprep.subr.mxu0 0.0
    %673 = vmatpush2.msra.mxu0 0.0
    %674 = vmatprep.subr.mxu0 0.0
    %675 = vmatpush2.msra.mxu0 0.0
    %676 = vmatprep.subr.mxu0 0.0
    %677 = vmatpush2.msra.mxu0 0.0
    %678 = vmatprep.subr.mxu0 0.0
    %679 = vmatpush2.msra.mxu0 0.0
    %680 = vmatprep.subr.mxu0 0.0
    %681 = vmatpush2.msra.mxu0 0.0
    %682 = vmatprep.subr.mxu0 0.0
    %683 = vmatpush2.msra.mxu0 0.0
    %684 = vmatprep.mubr.f32.mxu0 0.0
    %685 = vmatmul.mubr.f32.gmra.mxu0 %v529
    %v686 = vpop.f32.mrf.mxu0
    %v687 = vadd.f32 0.0, %v686
    %v688 = vpop.f32.mrf.mxu0
    %v689 = vadd.f32 0.0, %v688
    %690 = vmatprep.mubr.f32.mxu0 0.0
    %691 = vmatmul.mubr.f32.gmra.mxu0 %v532
    %v692 = vpop.f32.mrf.mxu0
    %v693 = vadd.f32 0.0, %v692
    %v694 = vpop.f32.mrf.mxu0
    %v695 = vadd.f32 0.0, %v694
    %696 = vmatprep.mubr.f32.mxu0 0.0
    %697 = vmatmul.mubr.f32.gmra.mxu0 %v535
    %v698 = vpop.f32.mrf.mxu0
    %v699 = vadd.f32 0.0, %v698
    %v700 = vpop.f32.mrf.mxu0
    %v701 = vadd.f32 0.0, %v700
    %702 = vdwg.mxu0
    %703 = vmatprep.subr.mxu0 0.0
    %704 = vmatpush1.msra.mxu0 0.0
    %705 = vmatprep.subr.mxu0 0.0
    %706 = vmatpush1.msra.mxu0 0.0
    %707 = vmatprep.subr.mxu0 0.0
    %708 = vmatpush1.msra.mxu0 0.0
    %709 = vmatprep.subr.mxu0 0.0
    %710 = vmatpush1.msra.mxu0 0.0
    %711 = vmatprep.subr.mxu0 0.0
    %712 = vmatpush1.msra.mxu0 0.0
    %713 = vmatprep.subr.mxu0 0.0
    %714 = vmatpush1.msra.mxu0 0.0
    %715 = vmatprep.subr.mxu0 0.0
    %716 = vmatpush1.msra.mxu0 0.0
    %717 = vmatprep.subr.mxu0 0.0
    %718 = vmatpush1.msra.mxu0 0.0
    %719 = vmatprep.subr.mxu0 0.0
    %720 = vmatpush1.msra.mxu0 0.0
    %721 = vmatprep.subr.mxu0 0.0
    %722 = vmatpush1.msra.mxu0 0.0
    %723 = vmatprep.subr.mxu0 0.0
    %724 = vmatpush1.msra.mxu0 0.0
    %725 = vmatprep.subr.mxu0 0.0
    %726 = vmatpush1.msra.mxu0 0.0
    %727 = vmatprep.subr.mxu0 0.0
    %728 = vmatpush1.msra.mxu0 0.0
    %729 = vmatprep.subr.mxu0 %v524
    %730 = vmatpush1.msra.mxu0 %v519
    %731 = vmatprep.subr.mxu0 %v488
    %732 = vmatpush1.msra.mxu0 %v487
    %733 = vmatprep.subr.mxu0 %v501
    %734 = vmatpush1.msra.mxu0 %v502
    %735 = vmatprep.subr.mxu0 0.0
    %736 = vmatpush2.msra.mxu0 0.0
    %737 = vmatprep.subr.mxu0 0.0
    %738 = vmatpush2.msra.mxu0 0.0
    %739 = vmatprep.subr.mxu0 0.0
    %740 = vmatpush2.msra.mxu0 0.0
    %741 = vmatprep.subr.mxu0 0.0
    %742 = vmatpush2.msra.mxu0 0.0
    %743 = vmatprep.subr.mxu0 0.0
    %744 = vmatpush2.msra.mxu0 0.0
    %745 = vmatprep.subr.mxu0 0.0
    %746 = vmatpush2.msra.mxu0 0.0
    %747 = vmatprep.subr.mxu0 0.0
    %748 = vmatpush2.msra.mxu0 0.0
    %749 = vmatprep.subr.mxu0 0.0
    %750 = vmatpush2.msra.mxu0 0.0
    %751 = vmatprep.subr.mxu0 0.0
    %752 = vmatpush2.msra.mxu0 0.0
    %753 = vmatprep.subr.mxu0 0.0
    %754 = vmatpush2.msra.mxu0 0.0
    %755 = vmatprep.subr.mxu0 0.0
    %756 = vmatpush2.msra.mxu0 0.0
    %757 = vmatprep.subr.mxu0 0.0
    %758 = vmatpush2.msra.mxu0 0.0
    %759 = vmatprep.subr.mxu0 0.0
    %760 = vmatpush2.msra.mxu0 0.0
    %761 = vmatprep.subr.mxu0 0.0
    %762 = vmatpush2.msra.mxu0 0.0
    %763 = vmatprep.subr.mxu0 0.0
    %764 = vmatpush2.msra.mxu0 0.0
    %765 = vmatprep.subr.mxu0 0.0
    %766 = vmatpush2.msra.mxu0 0.0
    %767 = vmatprep.mubr.f32.mxu0 0.0
    %768 = vmatmul.mubr.f32.gmra.mxu0 %v529
    %v769 = vpop.f32.mrf.mxu0
    %v770 = vadd.f32 0.0, %v769
    %v771 = vpop.f32.mrf.mxu0
    %v772 = vadd.f32 0.0, %v771
    %773 = vmatprep.mubr.f32.mxu0 0.0
    %774 = vmatmul.mubr.f32.gmra.mxu0 %v532
    %v775 = vpop.f32.mrf.mxu0
    %v776 = vadd.f32 0.0, %v775
    %v777 = vpop.f32.mrf.mxu0
    %v778 = vadd.f32 0.0, %v777
    %779 = vmatprep.mubr.f32.mxu0 0.0
    %780 = vmatmul.mubr.f32.gmra.mxu0 %v535
    %v781 = vpop.f32.mrf.mxu0
    %v782 = vadd.f32 0.0, %v781
    %v783 = vpop.f32.mrf.mxu0
    %v784 = vadd.f32 0.0, %v783
    %785 = vdwg.mxu0
    %786 = vrot.lane.b32.xlu0 %v604, 1
    %v787 = vpop.permute.xlu0 %786
    %788 = vrot.lane.b32.xlu0 %v606, 1
    %v789 = vpop.permute.xlu0 %788
    %790 = vrot.lane.b32.xlu0 %v687, 1
    %v791 = vpop.permute.xlu0 %790
    %792 = vrot.lane.b32.xlu0 %v689, 1
    %v793 = vpop.permute.xlu0 %792
    %794 = vrot.lane.b32.xlu0 %v770, 1
    %v795 = vpop.permute.xlu0 %794
    %796 = vrot.lane.b32.xlu0 %v772, 1
    %v797 = vpop.permute.xlu0 %796
    %v798 = vsel %vm390, %v795, %v797
    %v799 = vsel %vm390, %v793, %v795
    %v800 = vsel %vm390, %v791, %v793
    %v801 = vsel %vm390, %v789, %v791
    %v802 = vsel %vm390, %v787, %v789
    %v803 = vsel %vm390, %v797, %v787
    %v804 = vadd.f32 %v610, %v803
    %v805 = vadd.f32 %v612, %v802
    %v806 = vadd.f32 %v693, %v801
    %v807 = vadd.f32 %v695, %v800
    %v808 = vadd.f32 %v776, %v799
    %v809 = vadd.f32 %v778, %v798
    %810 = vrot.lane.b32.xlu0 %v616, 127
    %v811 = vpop.permute.xlu0 %810
    %812 = vrot.lane.b32.xlu0 %v618, 127
    %v813 = vpop.permute.xlu0 %812
    %814 = vrot.lane.b32.xlu0 %v699, 127
    %v815 = vpop.permute.xlu0 %814
    %816 = vrot.lane.b32.xlu0 %v701, 127
    %v817 = vpop.permute.xlu0 %816
    %818 = vrot.lane.b32.xlu0 %v782, 127
    %v819 = vpop.permute.xlu0 %818
    %820 = vrot.lane.b32.xlu0 %v784, 127
    %v821 = vpop.permute.xlu0 %820
    %v822 = vsel %vm415, %v819, %v821
    %v823 = vsel %vm415, %v817, %v819
    %v824 = vsel %vm415, %v815, %v817
    %v825 = vsel %vm415, %v813, %v815
    %v826 = vsel %vm415, %v811, %v813
    %v827 = vsel %vm415, %v821, %v811
    %v828 = vadd.f32 %v804, %v826
    %v829 = vadd.f32 %v805, %v825
    %v830 = vadd.f32 %v806, %v824
    %v831 = vadd.f32 %v807, %v823
    %v832 = vadd.f32 %v808, %v822
    %v833 = vadd.f32 %v809, %v827
    %v834 = vld [vmem:[%s5] sm:$0xff]
    %836 = vset.pattern.permute.xlu0 0
    %837 = vperm.xlu0 %836, %v834
    %v838 = vpop.permute.xlu0 %837
    %v840 = vadd.f32 %v828, %v838
    %v841 = vadd.f32 %v829, %v838
    %v842 = vadd.f32 %v830, %v838
    %v843 = vadd.f32 %v831, %v838
    %v844 = vadd.f32 %v832, %v838
    %v845 = vadd.f32 %v833, %v838
    %v846 = vmul.f32 %v840, 0.2
    %v847 = vmul.f32 %v841, 0.2
    %v848 = vmul.f32 %v842, 0.2
    %v849 = vmul.f32 %v843, 0.2
    %v850 = vmul.f32 %v844, 0.2
    %v851 = vmul.f32 %v845, 0.2
    %v852 = vmax.f32 %v840, %v846
    %v853 = vmax.f32 %v841, %v847
    %v854 = vmax.f32 %v842, %v848
    %v855 = vmax.f32 %v843, %v849
    %v856 = vmax.f32 %v844, %v850
    %v857 = vmax.f32 %v845, %v851
    %v858 = vmul.f32 %v852, %v456
    %v859 = vmul.f32 %v853, %v460
    %v860 = vmul.f32 %v854, %v464
    %v861 = vmul.f32 %v855, %v468
    %v862 = vmul.f32 %v856, %v472
    %v863 = vmul.f32 %v857, %v476
    %864 = vrot.lane.b32.xlu0 %v858, 18
    %v865 = vpop.permute.xlu0 %864
    %866 = vrot.lane.b32.xlu0 %v859, 18
    %v867 = vpop.permute.xlu0 %866
    %868 = vrot.lane.b32.xlu0 %v860, 18
    %v869 = vpop.permute.xlu0 %868
    %870 = vrot.lane.b32.xlu0 %v861, 18
    %v871 = vpop.permute.xlu0 %870
    %872 = vrot.lane.b32.xlu0 %v862, 18
    %v873 = vpop.permute.xlu0 %872
    %874 = vrot.lane.b32.xlu0 %v863, 18
    %v875 = vpop.permute.xlu0 %874
    %v876 = vsel %vm90, %v873, %v875
    %v877 = vsel %vm90, %v871, %v873
    %v878 = vsel %vm90, %v869, %v871
    %v879 = vsel %vm90, %v867, %v869
    %v880 = vsel %vm90, %v865, %v867
    %v881 = vsel %vm90, %v875, %v865
    %882 = vrot.lane.b32.xlu0 %v858, 110
    %v883 = vpop.permute.xlu0 %882
    %884 = vrot.lane.b32.xlu0 %v859, 110
    %v885 = vpop.permute.xlu0 %884
    %886 = vrot.lane.b32.xlu0 %v860, 110
    %v887 = vpop.permute.xlu0 %886
    %888 = vrot.lane.b32.xlu0 %v861, 110
    %v889 = vpop.permute.xlu0 %888
    %890 = vrot.lane.b32.xlu0 %v862, 110
    %v891 = vpop.permute.xlu0 %890
    %892 = vrot.lane.b32.xlu0 %v863, 110
    %v893 = vpop.permute.xlu0 %892
    %v894 = vsel %vm109, %v891, %v893
    %v895 = vsel %vm109, %v889, %v891
    %v896 = vsel %vm109, %v887, %v889
    %v897 = vsel %vm109, %v885, %v887
    %v898 = vsel %vm109, %v883, %v885
    %v899 = vsel %vm109, %v893, %v883
    %v900 = vld [vmem:[#allocation7] sm:$0xff]
    %v901 = vld [vmem:[#allocation7 + $0x8] sm:$0xff]
    %v902 = vld [vmem:[#allocation7 + $0x10] sm:$0xff]
    %v904 = vsel %vm119, %v900, 0
    %v907 = vsel %vm119, %v901, 0
    %v910 = vsel %vm119, %v902, 0
    %912 = vmatprep.subr.mxu0 0.0
    %913 = vmatpush1.msra.mxu0 0.0
    %914 = vmatprep.subr.mxu0 0.0
    %915 = vmatpush1.msra.mxu0 0.0
    %916 = vmatprep.subr.mxu0 0.0
    %917 = vmatpush1.msra.mxu0 0.0
    %918 = vmatprep.subr.mxu0 0.0
    %919 = vmatpush1.msra.mxu0 0.0
    %920 = vmatprep.subr.mxu0 0.0
    %921 = vmatpush1.msra.mxu0 0.0
    %922 = vmatprep.subr.mxu0 0.0
    %923 = vmatpush1.msra.mxu0 0.0
    %924 = vmatprep.subr.mxu0 0.0
    %925 = vmatpush1.msra.mxu0 0.0
    %926 = vmatprep.subr.mxu0 0.0
    %927 = vmatpush1.msra.mxu0 0.0
    %928 = vmatprep.subr.mxu0 0.0
    %929 = vmatpush1.msra.mxu0 0.0
    %930 = vmatprep.subr.mxu0 0.0
    %931 = vmatpush1.msra.mxu0 0.0
    %932 = vmatprep.subr.mxu0 0.0
    %933 = vmatpush1.msra.mxu0 0.0
    %934 = vmatprep.subr.mxu0 0.0
    %935 = vmatpush1.msra.mxu0 0.0
    %936 = vmatprep.subr.mxu0 0.0
    %937 = vmatpush1.msra.mxu0 0.0
    %938 = vmatprep.subr.mxu0 %v897
    %939 = vmatpush1.msra.mxu0 %v898
    %940 = vmatprep.subr.mxu0 %v859
    %941 = vmatpush1.msra.mxu0 %v858
    %942 = vmatprep.subr.mxu0 %v880
    %943 = vmatpush1.msra.mxu0 %v881
    %944 = vmatprep.subr.mxu0 0.0
    %945 = vmatpush2.msra.mxu0 0.0
    %946 = vmatprep.subr.mxu0 0.0
    %947 = vmatpush2.msra.mxu0 0.0
    %948 = vmatprep.subr.mxu0 0.0
    %949 = vmatpush2.msra.mxu0 0.0
    %950 = vmatprep.subr.mxu0 0.0
    %951 = vmatpush2.msra.mxu0 0.0
    %952 = vmatprep.subr.mxu0 0.0
    %953 = vmatpush2.msra.mxu0 0.0
    %954 = vmatprep.subr.mxu0 0.0
    %955 = vmatpush2.msra.mxu0 0.0
    %956 = vmatprep.subr.mxu0 0.0
    %957 = vmatpush2.msra.mxu0 0.0
    %958 = vmatprep.subr.mxu0 0.0
    %959 = vmatpush2.msra.mxu0 0.0
    %960 = vmatprep.subr.mxu0 0.0
    %961 = vmatpush2.msra.mxu0 0.0
    %962 = vmatprep.subr.mxu0 0.0
    %963 = vmatpush2.msra.mxu0 0.0
    %964 = vmatprep.subr.mxu0 0.0
    %965 = vmatpush2.msra.mxu0 0.0
    %966 = vmatprep.subr.mxu0 0.0
    %967 = vmatpush2.msra.mxu0 0.0
    %968 = vmatprep.subr.mxu0 0.0
    %969 = vmatpush2.msra.mxu0 0.0
    %970 = vmatprep.subr.mxu0 0.0
    %971 = vmatpush2.msra.mxu0 0.0
    %972 = vmatprep.subr.mxu0 0.0
    %973 = vmatpush2.msra.mxu0 0.0
    %974 = vmatprep.subr.mxu0 0.0
    %975 = vmatpush2.msra.mxu0 0.0
    %976 = vmatprep.mubr.f32.mxu0 0.0
    %977 = vmatmul.mubr.f32.gmra.mxu0 %v904
    %v978 = vpop.f32.mrf.mxu0
    %v979 = vadd.f32 0.0, %v978
    %v980 = vpop.f32.mrf.mxu0
    %v981 = vadd.f32 0.0, %v980
    %982 = vmatprep.mubr.f32.mxu0 0.0
    %983 = vmatmul.mubr.f32.gmra.mxu0 %v907
    %v984 = vpop.f32.mrf.mxu0
    %v985 = vadd.f32 0.0, %v984
    %v986 = vpop.f32.mrf.mxu0
    %v987 = vadd.f32 0.0, %v986
    %988 = vmatprep.mubr.f32.mxu0 0.0
    %989 = vmatmul.mubr.f32.gmra.mxu0 %v910
    %v990 = vpop.f32.mrf.mxu0
    %v991 = vadd.f32 0.0, %v990
    %v992 = vpop.f32.mrf.mxu0
    %v993 = vadd.f32 0.0, %v992
    %994 = vdwg.mxu0
    %995 = vmatprep.subr.mxu0 0.0
    %996 = vmatpush1.msra.mxu0 0.0
    %997 = vmatprep.subr.mxu0 0.0
    %998 = vmatpush1.msra.mxu0 0.0
    %999 = vmatprep.subr.mxu0 0.0
    %1000 = vmatpush1.msra.mxu0 0.0
    %1001 = vmatprep.subr.mxu0 0.0
    %1002 = vmatpush1.msra.mxu0 0.0
    %1003 = vmatprep.subr.mxu0 0.0
    %1004 = vmatpush1.msra.mxu0 0.0
    %1005 = vmatprep.subr.mxu0 0.0
    %1006 = vmatpush1.msra.mxu0 0.0
    %1007 = vmatprep.subr.mxu0 0.0
    %1008 = vmatpush1.msra.mxu0 0.0
    %1009 = vmatprep.subr.mxu0 0.0
    %1010 = vmatpush1.msra.mxu0 0.0
    %1011 = vmatprep.subr.mxu0 0.0
    %1012 = vmatpush1.msra.mxu0 0.0
    %1013 = vmatprep.subr.mxu0 0.0
    %1014 = vmatpush1.msra.mxu0 0.0
    %1015 = vmatprep.subr.mxu0 0.0
    %1016 = vmatpush1.msra.mxu0 0.0
    %1017 = vmatprep.subr.mxu0 0.0
    %1018 = vmatpush1.msra.mxu0 0.0
    %1019 = vmatprep.subr.mxu0 0.0
    %1020 = vmatpush1.msra.mxu0 0.0
    %1021 = vmatprep.subr.mxu0 %v895
    %1022 = vmatpush1.msra.mxu0 %v896
    %1023 = vmatprep.subr.mxu0 %v861
    %1024 = vmatpush1.msra.mxu0 %v860
    %1025 = vmatprep.subr.mxu0 %v878
    %1026 = vmatpush1.msra.mxu0 %v879
    %1027 = vmatprep.subr.mxu0 0.0
    %1028 = vmatpush2.msra.mxu0 0.0
    %1029 = vmatprep.subr.mxu0 0.0
    %1030 = vmatpush2.msra.mxu0 0.0
    %1031 = vmatprep.subr.mxu0 0.0
    %1032 = vmatpush2.msra.mxu0 0.0
    %1033 = vmatprep.subr.mxu0 0.0
    %1034 = vmatpush2.msra.mxu0 0.0
    %1035 = vmatprep.subr.mxu0 0.0
    %1036 = vmatpush2.msra.mxu0 0.0
    %1037 = vmatprep.subr.mxu0 0.0
    %1038 = vmatpush2.msra.mxu0 0.0
    %1039 = vmatprep.subr.mxu0 0.0
    %1040 = vmatpush2.msra.mxu0 0.0
    %1041 = vmatprep.subr.mxu0 0.0
    %1042 = vmatpush2.msra.mxu0 0.0
    %1043 = vmatprep.subr.mxu0 0.0
    %1044 = vmatpush2.msra.mxu0 0.0
    %1045 = vmatprep.subr.mxu0 0.0
    %1046 = vmatpush2.msra.mxu0 0.0
    %1047 = vmatprep.subr.mxu0 0.0
    %1048 = vmatpush2.msra.mxu0 0.0
    %1049 = vmatprep.subr.mxu0 0.0
    %1050 = vmatpush2.msra.mxu0 0.0
    %1051 = vmatprep.subr.mxu0 0.0
    %1052 = vmatpush2.msra.mxu0 0.0
    %1053 = vmatprep.subr.mxu0 0.0
    %1054 = vmatpush2.msra.mxu0 0.0
    %1055 = vmatprep.subr.mxu0 0.0
    %1056 = vmatpush2.msra.mxu0 0.0
    %1057 = vmatprep.subr.mxu0 0.0
    %1058 = vmatpush2.msra.mxu0 0.0
    %1059 = vmatprep.mubr.f32.mxu0 0.0
    %1060 = vmatmul.mubr.f32.gmra.mxu0 %v904
    %v1061 = vpop.f32.mrf.mxu0
    %v1062 = vadd.f32 0.0, %v1061
    %v1063 = vpop.f32.mrf.mxu0
    %v1064 = vadd.f32 0.0, %v1063
    %1065 = vmatprep.mubr.f32.mxu0 0.0
    %1066 = vmatmul.mubr.f32.gmra.mxu0 %v907
    %v1067 = vpop.f32.mrf.mxu0
    %v1068 = vadd.f32 0.0, %v1067
    %v1069 = vpop.f32.mrf.mxu0
    %v1070 = vadd.f32 0.0, %v1069
    %1071 = vmatprep.mubr.f32.mxu0 0.0
    %1072 = vmatmul.mubr.f32.gmra.mxu0 %v910
    %v1073 = vpop.f32.mrf.mxu0
    %v1074 = vadd.f32 0.0, %v1073
    %v1075 = vpop.f32.mrf.mxu0
    %v1076 = vadd.f32 0.0, %v1075
    %1077 = vdwg.mxu0
    %1078 = vmatprep.subr.mxu0 0.0
    %1079 = vmatpush1.msra.mxu0 0.0
    %1080 = vmatprep.subr.mxu0 0.0
    %1081 = vmatpush1.msra.mxu0 0.0
    %1082 = vmatprep.subr.mxu0 0.0
    %1083 = vmatpush1.msra.mxu0 0.0
    %1084 = vmatprep.subr.mxu0 0.0
    %1085 = vmatpush1.msra.mxu0 0.0
    %1086 = vmatprep.subr.mxu0 0.0
    %1087 = vmatpush1.msra.mxu0 0.0
    %1088 = vmatprep.subr.mxu0 0.0
    %1089 = vmatpush1.msra.mxu0 0.0
    %1090 = vmatprep.subr.mxu0 0.0
    %1091 = vmatpush1.msra.mxu0 0.0
    %1092 = vmatprep.subr.mxu0 0.0
    %1093 = vmatpush1.msra.mxu0 0.0
    %1094 = vmatprep.subr.mxu0 0.0
    %1095 = vmatpush1.msra.mxu0 0.0
    %1096 = vmatprep.subr.mxu0 0.0
    %1097 = vmatpush1.msra.mxu0 0.0
    %1098 = vmatprep.subr.mxu0 0.0
    %1099 = vmatpush1.msra.mxu0 0.0
    %1100 = vmatprep.subr.mxu0 0.0
    %1101 = vmatpush1.msra.mxu0 0.0
    %1102 = vmatprep.subr.mxu0 0.0
    %1103 = vmatpush1.msra.mxu0 0.0
    %1104 = vmatprep.subr.mxu0 %v899
    %1105 = vmatpush1.msra.mxu0 %v894
    %1106 = vmatprep.subr.mxu0 %v863
    %1107 = vmatpush1.msra.mxu0 %v862
    %1108 = vmatprep.subr.mxu0 %v876
    %1109 = vmatpush1.msra.mxu0 %v877
    %1110 = vmatprep.subr.mxu0 0.0
    %1111 = vmatpush2.msra.mxu0 0.0
    %1112 = vmatprep.subr.mxu0 0.0
    %1113 = vmatpush2.msra.mxu0 0.0
    %1114 = vmatprep.subr.mxu0 0.0
    %1115 = vmatpush2.msra.mxu0 0.0
    %1116 = vmatprep.subr.mxu0 0.0
    %1117 = vmatpush2.msra.mxu0 0.0
    %1118 = vmatprep.subr.mxu0 0.0
    %1119 = vmatpush2.msra.mxu0 0.0
    %1120 = vmatprep.subr.mxu0 0.0
    %1121 = vmatpush2.msra.mxu0 0.0
    %1122 = vmatprep.subr.mxu0 0.0
    %1123 = vmatpush2.msra.mxu0 0.0
    %1124 = vmatprep.subr.mxu0 0.0
    %1125 = vmatpush2.msra.mxu0 0.0
    %1126 = vmatprep.subr.mxu0 0.0
    %1127 = vmatpush2.msra.mxu0 0.0
    %1128 = vmatprep.subr.mxu0 0.0
    %1129 = vmatpush2.msra.mxu0 0.0
    %1130 = vmatprep.subr.mxu0 0.0
    %1131 = vmatpush2.msra.mxu0 0.0
    %1132 = vmatprep.subr.mxu0 0.0
    %1133 = vmatpush2.msra.mxu0 0.0
    %1134 = vmatprep.subr.mxu0 0.0
    %1135 = vmatpush2.msra.mxu0 0.0
    %1136 = vmatprep.subr.mxu0 0.0
    %1137 = vmatpush2.msra.mxu0 0.0
    %1138 = vmatprep.subr.mxu0 0.0
    %1139 = vmatpush2.msra.mxu0 0.0
    %1140 = vmatprep.subr.mxu0 0.0
    %1141 = vmatpush2.msra.mxu0 0.0
    %1142 = vmatprep.mubr.f32.mxu0 0.0
    %1143 = vmatmul.mubr.f32.gmra.mxu0 %v904
    %v1144 = vpop.f32.mrf.mxu0
    %v1145 = vadd.f32 0.0, %v1144
    %v1146 = vpop.f32.mrf.mxu0
    %v1147 = vadd.f32 0.0, %v1146
    %1148 = vmatprep.mubr.f32.mxu0 0.0
    %1149 = vmatmul.mubr.f32.gmra.mxu0 %v907
    %v1150 = vpop.f32.mrf.mxu0
    %v1151 = vadd.f32 0.0, %v1150
    %v1152 = vpop.f32.mrf.mxu0
    %v1153 = vadd.f32 0.0, %v1152
    %1154 = vmatprep.mubr.f32.mxu0 0.0
    %1155 = vmatmul.mubr.f32.gmra.mxu0 %v910
    %v1156 = vpop.f32.mrf.mxu0
    %v1157 = vadd.f32 0.0, %v1156
    %v1158 = vpop.f32.mrf.mxu0
    %v1159 = vadd.f32 0.0, %v1158
    %1160 = vdwg.mxu0
    %1161 = vrot.lane.b32.xlu0 %v979, 1
    %v1162 = vpop.permute.xlu0 %1161
    %1163 = vrot.lane.b32.xlu0 %v981, 1
    %v1164 = vpop.permute.xlu0 %1163
    %1165 = vrot.lane.b32.xlu0 %v1062, 1
    %v1166 = vpop.permute.xlu0 %1165
    %1167 = vrot.lane.b32.xlu0 %v1064, 1
    %v1168 = vpop.permute.xlu0 %1167
    %1169 = vrot.lane.b32.xlu0 %v1145, 1
    %v1170 = vpop.permute.xlu0 %1169
    %1171 = vrot.lane.b32.xlu0 %v1147, 1
    %v1172 = vpop.permute.xlu0 %1171
    %v1173 = vsel %vm390, %v1170, %v1172
    %v1174 = vsel %vm390, %v1168, %v1170
    %v1175 = vsel %vm390, %v1166, %v1168
    %v1176 = vsel %vm390, %v1164, %v1166
    %v1177 = vsel %vm390, %v1162, %v1164
    %v1178 = vsel %vm390, %v1172, %v1162
    %v1179 = vadd.f32 %v985, %v1178
    %v1180 = vadd.f32 %v987, %v1177
    %v1181 = vadd.f32 %v1068, %v1176
    %v1182 = vadd.f32 %v1070, %v1175
    %v1183 = vadd.f32 %v1151, %v1174
    %v1184 = vadd.f32 %v1153, %v1173
    %1185 = vrot.lane.b32.xlu0 %v991, 127
    %v1186 = vpop.permute.xlu0 %1185
    %1187 = vrot.lane.b32.xlu0 %v993, 127
    %v1188 = vpop.permute.xlu0 %1187
    %1189 = vrot.lane.b32.xlu0 %v1074, 127
    %v1190 = vpop.permute.xlu0 %1189
    %1191 = vrot.lane.b32.xlu0 %v1076, 127
    %v1192 = vpop.permute.xlu0 %1191
    %1193 = vrot.lane.b32.xlu0 %v1157, 127
    %v1194 = vpop.permute.xlu0 %1193
    %1195 = vrot.lane.b32.xlu0 %v1159, 127
    %v1196 = vpop.permute.xlu0 %1195
    %v1197 = vsel %vm415, %v1194, %v1196
    %v1198 = vsel %vm415, %v1192, %v1194
    %v1199 = vsel %vm415, %v1190, %v1192
    %v1200 = vsel %vm415, %v1188, %v1190
    %v1201 = vsel %vm415, %v1186, %v1188
    %v1202 = vsel %vm415, %v1196, %v1186
    %v1203 = vadd.f32 %v1179, %v1201
    %v1204 = vadd.f32 %v1180, %v1200
    %v1205 = vadd.f32 %v1181, %v1199
    %v1206 = vadd.f32 %v1182, %v1198
    %v1207 = vadd.f32 %v1183, %v1197
    %v1208 = vadd.f32 %v1184, %v1202
    %v1209 = vld [vmem:[%s7] sm:$0xff]
    %1211 = vset.pattern.permute.xlu0 0
    %1212 = vperm.xlu0 %1211, %v1209
    %v1213 = vpop.permute.xlu0 %1212
    %v1215 = vadd.f32 %v1203, %v1213
    %v1216 = vadd.f32 %v1204, %v1213
    %v1217 = vadd.f32 %v1205, %v1213
    %v1218 = vadd.f32 %v1206, %v1213
    %v1219 = vadd.f32 %v1207, %v1213
    %v1220 = vadd.f32 %v1208, %v1213
    %v1221 = vmul.f32 %v1215, 0.2
    %v1222 = vmul.f32 %v1216, 0.2
    %v1223 = vmul.f32 %v1217, 0.2
    %v1224 = vmul.f32 %v1218, 0.2
    %v1225 = vmul.f32 %v1219, 0.2
    %v1226 = vmul.f32 %v1220, 0.2
    %v1227 = vmax.f32 %v1215, %v1221
    %v1228 = vmax.f32 %v1216, %v1222
    %v1229 = vmax.f32 %v1217, %v1223
    %v1230 = vmax.f32 %v1218, %v1224
    %v1231 = vmax.f32 %v1219, %v1225
    %v1232 = vmax.f32 %v1220, %v1226
    %1233 = vst [vmem:[#allocation8] sm:$0xff] %v1227
    %1234 = vst [vmem:[#allocation8 + $0x8] sm:$0xff] %v1228
    %1235 = vst [vmem:[#allocation8 + $0x10] sm:$0xff] %v1229
    %1236 = vst [vmem:[#allocation8 + $0x18] sm:$0xff] %v1230
    %1237 = vst [vmem:[#allocation8 + $0x20] sm:$0xff] %v1231
    %1238 = vst [vmem:[#allocation8 + $0x28] sm:$0xff] %v1232
    // Predicated region
    $region46: #{tpu_custom_call.1} parent=1 // pred_check
      _
    $region47: #{tpu_custom_call.1} parent=1 // pred_check_branch
      %1240 = sbr.rel (0) target = $region49
    $region48: #{tpu_custom_call.1} parent=1 // pred_region
      %s1242 = ssub.s32 768, 768
      %1243 = vsyncadd [#allocation4], %s1242
      %s1245 = sshll.u32 [#allocation8], 4
      %s1246 = int_to_ptr.vmem [resolvable:$true] %s1245
      %1248 = dma.vmem_to_hbm [thread:$0]  %s1246, 768, %s8, [#allocation4]
    $region49: #{tpu_custom_call.1} parent=1 // pred_fallthru
      _
    // Predicated region
    $region50: #{tpu_custom_call.1} parent=1 // pred_check
      _
    $region51: #{tpu_custom_call.1} parent=1 // pred_check_branch
      %1250 = sbr.rel (0) target = $region53
    $region52: #{tpu_custom_call.1} parent=1 // pred_region
      %1251 = dma.done [#allocation4], 768
    $region53: #{tpu_custom_call.1} parent=1 // pred_fallthru
      _
    %1252 = vsyncpa [#allocation3], 1
    %1253 = vsyncpa [#allocation6], 1
    %1254 = vsyncpa [#allocation4], 1

</llo_original>
